<compile_context>
chip_gen: v7x
topology: tpu7x:2x2x1
jax: 0.10.0
libtpu: 0.0.40
codegen_flags: <defaults>
</compile_context>

<pallas_src>
import jax
import jax.numpy as jnp
import numpy as np
from jax.experimental import pallas as pl
from jax.experimental.pallas import tpu as pltpu


def _hbm_copy_kernel(w_ref, o_ref, sem):
    # Single HBM->HBM DMA: no VMEM round trip, no in-kernel vld/vst copy.
    cp = pltpu.make_async_copy(w_ref, o_ref, sem)
    cp.start()
    cp.wait()


def _prototype_copy(w: jax.Array) -> jax.Array:
    return pl.pallas_call(
        _hbm_copy_kernel,
        out_shape=jax.ShapeDtypeStruct(w.shape, w.dtype),
        in_specs=[pl.BlockSpec(memory_space=pl.ANY)],
        out_specs=pl.BlockSpec(memory_space=pl.ANY),
        scratch_shapes=[pltpu.SemaphoreType.DMA(())],
    )(w)


@jax.jit
def learnable_prototypes_forward(class_embeddings_weight: jax.Array) -> jax.Array:
    """Pallas equivalent of Learnable_Prototypes.forward().

    NOTE: the zero-cost implementation is simply
        `return class_embeddings_weight`
    (XLA aliases the parameter).  The pallas_call here is kept for
    framework-shape reasons and is reduced to one gridless HBM->HBM DMA.
    """
    return _prototype_copy(class_embeddings_weight)


def init_learnable_prototypes(key, num_classes=7, feat_dim=256, dtype=jnp.float32):
    """Mirror nn.Embedding default init (N(0, 1))."""
    return jax.random.normal(key, (num_classes, feat_dim), dtype=dtype)


if __name__ == "__main__":
    num_classes, feat_dim = 7, 256
    key = jax.random.PRNGKey(0)
    class_embeddings_weight = init_learnable_prototypes(
        key, num_classes=num_classes, feat_dim=feat_dim)

    expected = np.asarray(class_embeddings_weight)

    out = learnable_prototypes_forward(class_embeddings_weight)
    out = jax.block_until_ready(out)

    assert out.shape == (num_classes, feat_dim), out.shape
    assert out.dtype == jnp.float32
    np.testing.assert_array_equal(np.asarray(out), expected)
    # No aliasing / donation: the source parameter buffer is untouched.
    np.testing.assert_array_equal(np.asarray(class_embeddings_weight), expected)

    print("KERNEL_OK")
</pallas_src>

<mosaic_0001>
module attributes {stable_mosaic.version = 11 : i64} {
  func.func @_hbm_copy_kernel(%arg0: memref<7x256xf32, #tpu.memory_space<any>>, %arg1: memref<7x256xf32, #tpu.memory_space<any>>, %arg2: memref<!tpu.dma_semaphore, #tpu.memory_space<semaphore_mem>>) attributes {dimension_semantics = [], scalar_prefetch = 0 : i64, scratch_operands = 1 : i64, tpu.core_type = #tpu.core_type<tc>} {
    tpu.enqueue_dma source(%arg0 : memref<7x256xf32, #tpu.memory_space<any>>) target(%arg1 : memref<7x256xf32, #tpu.memory_space<any>>) target_semaphore(%arg2 : memref<!tpu.dma_semaphore, #tpu.memory_space<semaphore_mem>>)
    tpu.wait_dma2 semaphore(%arg2 : memref<!tpu.dma_semaphore, #tpu.memory_space<semaphore_mem>>) src(%arg0 : memref<7x256xf32, #tpu.memory_space<any>>) dst(%arg1 : memref<7x256xf32, #tpu.memory_space<any>>)
    return
  }
}

</mosaic_0001>

<llo_original>
// kernel: learnable_prototypes_forward.1
$region0: #{learnable_prototypes_forward.1}
  #allocation0 [shape = 'u32[]', space=smem, size = 0x4, offset = 0x4, fixed_abs, tag = 'smem constant byte address 0x4 - core index']
  #allocation1 [shape = 'u32[144,128]{1,0:T(1,128)}', space=vmem, size = 0x12000, scoped, tag = 'internal scratch']
  #allocation2 [shape = 's32[1]{0}', space=sflag, size = 0x4, scoped, tag = 'scratch operand']
  #allocation3 [shape = 's32[]', space=sflag, size = 0x4, offset = 0, fixed_abs, tag = 'sflag constant byte address 0x0 - dummy sync flag']
  #allocation4 [shape = 'u32[0]{0}', space=smem, size = 0, offset = 0, fixed_abs, tag = 'smem constant byte address 0x0 - null']
  %s0 = inlined_call_operand.hbm [shape: f32[7,256], index: 0, kind: input, shape index: {}]
  %s1 = inlined_call_operand.hbm [shape: f32[7,256], index: 1, kind: output, shape index: {}]
  %s2 = sld [smem:[#allocation0]]
  $region2: #{learnable_prototypes_forward.1} parent=0
    _
  %s4 = ssub.s32 1, %s2
  %s5 = scalar_select 0, %s4, %s2
  %s7 = sshll.u32 1, 14
  %s8 = sxor.u32 4294967295, %s7
  %s11 = sshll.u32 3, 24
  %s12 = sxor.u32 4294967295, %s11
  %s13 = sand.u32 0, %s12
  %s15 = sor.u32 %s13, 0
  %18 = dma.general %s0, 256, %s1, [#allocation2], [#allocation3], [#allocation4], %s15, 0
  %s19 = smul.u32 8, 1
  %s20 = smul.u32 %s19, 2
  %s21 = sshll.u32 %s20, 4
  %22 = dma.done [#allocation2], %s21
  %23 = vsyncmov [#allocation2]
  %s24 = vpop.sfrf %23
  %p25 = scmp.eq.s32.totalorder %s24, 0
  %p26 = pneg %p25
  %28 = shalt.err (%p26)

</llo_original>
